<compile_context>
chip_gen: v7x
topology: tpu7x:2x2x1
jax: 0.10.0
libtpu: 0.0.40
codegen_flags: <defaults>
</compile_context>

<pallas_src>
import functools

import jax
import jax.numpy as jnp
from jax.experimental import pallas as pl
from jax.experimental.pallas import tpu as pltpu

TEMPERATURE = 4.0
NEG_BIG = -1e30


def _round_up(v, m):
    return (v + m - 1) // m * m


def _distiller_kernel(lbl_ref, x_ref, w_ref, b_ref, o_ref, loss_ref,
                      *, temperature):
    """One batch tile of the distillation forward.

    lbl_ref:  [Bt, 1]        int32   labels (-1 for padded rows)
    x_ref:    [Bt, D]        bf16    flattened images (zero for padded rows)
    w_ref:    [D, 2*K_pad]   bf16    fused [student | teacher] weights
                                     (zero in padded class columns)
    b_ref:    [1, 2*K_pad]   f32     fused biases (-1e30 in padded columns)
    o_ref:    [Bt, 2*K_pad]  f32     fused [student | teacher] logits
    loss_ref: [1, 8, 128]    f32     per-tile partial loss sum (broadcast)
    """
    bt_rows = x_ref.shape[0]
    k_pad = o_ref.shape[1] // 2

    # --- fused student+teacher linear heads: one MXU pass over x ---
    logits = jnp.dot(x_ref[...], w_ref[...],
                     preferred_element_type=jnp.float32) + b_ref[...]
    o_ref[...] = logits                              # single lane-dense store
    s = logits[:, :k_pad]                            # padded lanes are -1e30
    t = logits[:, k_pad:]

    lbl = lbl_ref[...]                               # [Bt, 1] int32
    row_valid = (lbl >= 0).astype(jnp.float32)       # [Bt, 1]
    col = jax.lax.broadcasted_iota(jnp.int32, (bt_rows, k_pad), 1)

    # --- cross entropy of student vs hard label (no one-hot materialised in
    #     HBM; padded class lanes are already -1e30 via the bias) ---
    s_max = jnp.max(s, axis=-1, keepdims=True)
    s_sh = s - s_max
    lse_s = jnp.log(jnp.sum(jnp.exp(s_sh), axis=-1, keepdims=True))
    one_hot = (col == lbl).astype(jnp.float32)       # never hits padded lanes
    picked = jnp.sum(one_hot * s_sh, axis=-1, keepdims=True)   # s_sh[label]
    ce_sum = jnp.sum(row_valid * (lse_s - picked))

    # --- KD term: T^2 * KL(softmax(t/T) || softmax(s/T)) ---
    inv_t = jnp.float32(1.0 / temperature)
    st_sh = s_sh * inv_t                             # max(s/T) == max(s)/T
    t_max = jnp.max(t, axis=-1, keepdims=True)
    tt_sh = (t - t_max) * inv_t
    e_st = jnp.exp(st_sh)
    e_tt = jnp.exp(tt_sh)                            # padded lanes -> exactly 0
    z_s = jnp.sum(e_st, axis=-1, keepdims=True)
    z_t = jnp.sum(e_tt, axis=-1, keepdims=True)
    lse_s_t = jnp.log(z_s)
    lse_t_t = jnp.log(z_t)
    pt = e_tt * pl.reciprocal(z_t, approx=True)      # softmax(t/T), reused exp
    kl_row = jnp.sum(pt * ((tt_sh - st_sh) + (lse_s_t - lse_t_t)),
                     axis=-1, keepdims=True)
    kd_sum = jnp.sum(row_valid * kl_row) * jnp.float32(temperature * temperature)

    # Per-tile partial sum, broadcast over a lane-dense (8,128) block.
    loss_ref[...] = jnp.full(loss_ref.shape, ce_sum + kd_sum, dtype=jnp.float32)


@functools.partial(jax.jit, static_argnames=("num_classes",))
def distiller_forward(image, label, ws, bs, wt, bt, *, num_classes):
    """Distillation forward pass.

    image: [B, C, H, W] (NCHW, as in PyTorch)
    label: [B] int class ids
    ws/bs: student linear head [D, K] / [1, K]
    wt/bt: teacher linear head [D, K] / [1, K]  (frozen)
    Returns (student_logits [B, K], teacher_logits [B, K], loss scalar).
    """
    B = image.shape[0]
    D = image.shape[1] * image.shape[2] * image.shape[3]
    K = num_classes

    K_pad = _round_up(K, 128)                 # lane-dense class dim

    # Batch tile: multiple of 16 (bf16 sublane packing), up to 512; split so
    # num_tiles >= 2 when the batch allows (v7x has 2 TensorCores per chip).
    B16 = _round_up(B, 16)
    Bt = min(512, B16)
    if B16 >= 32 and B16 // Bt < 2:
        Bt = _round_up((B16 + 1) // 2, 16)
    B_pad = _round_up(B, Bt)
    num_tiles = B_pad // Bt

    # --- wrapper-side packing / padding (cheap: bf16 before pad, no f32
    #     [B_pad, D] intermediate) ---
    x = image.reshape(B, D).astype(jnp.bfloat16)
    if B_pad != B:
        x = jnp.pad(x, ((0, B_pad - B), (0, 0)))
    lbl = label.astype(jnp.int32).reshape(B, 1)
    if B_pad != B:
        lbl = jnp.pad(lbl, ((0, B_pad - B), (0, 0)), constant_values=-1)

    pad_k = K_pad - K
    ws_b = jnp.pad(ws.astype(jnp.bfloat16), ((0, 0), (0, pad_k)))
    wt_b = jnp.pad(wt.astype(jnp.bfloat16), ((0, 0), (0, pad_k)))
    w_cat = jnp.concatenate([ws_b, wt_b], axis=1)           # [D, 2*K_pad] bf16
    bs_p = jnp.pad(bs.astype(jnp.float32), ((0, 0), (0, pad_k)),
                   constant_values=NEG_BIG)
    bt_p = jnp.pad(bt.astype(jnp.float32), ((0, 0), (0, pad_k)),
                   constant_values=NEG_BIG)
    b_cat = jnp.concatenate([bs_p, bt_p], axis=1)            # [1, 2*K_pad] f32

    kernel = functools.partial(_distiller_kernel, temperature=TEMPERATURE)

    cost = pl.CostEstimate(
        flops=2 * B_pad * D * (2 * K_pad),
        transcendentals=3 * B_pad * K_pad,
        bytes_accessed=(B_pad * D * 2              # x (bf16)
                        + D * 2 * K_pad * 2        # fused W (bf16)
                        + 2 * K_pad * 4            # fused bias
                        + B_pad * 4                # labels
                        + B_pad * 2 * K_pad * 4    # fused logits writeback
                        + num_tiles * 8 * 128 * 4),
    )

    fused_logits, loss_parts = pl.pallas_call(
        kernel,
        out_shape=(
            jax.ShapeDtypeStruct((B_pad, 2 * K_pad), jnp.float32),
            jax.ShapeDtypeStruct((num_tiles, 8, 128), jnp.float32),
        ),
        grid_spec=pltpu.PrefetchScalarGridSpec(
            num_scalar_prefetch=0,
            grid=(num_tiles,),
            in_specs=[
                pl.BlockSpec((Bt, 1), lambda i: (i, 0)),          # labels
                pl.BlockSpec((Bt, D), lambda i: (i, 0)),          # x tile
                pl.BlockSpec((D, 2 * K_pad), lambda i: (0, 0)),   # fused W
                pl.BlockSpec((1, 2 * K_pad), lambda i: (0, 0)),   # fused bias
            ],
            out_specs=(
                pl.BlockSpec((Bt, 2 * K_pad), lambda i: (i, 0)),
                pl.BlockSpec((1, 8, 128), lambda i: (i, 0, 0)),
            ),
        ),
        compiler_params=pltpu.CompilerParams(
            dimension_semantics=("parallel",),
            vmem_limit_bytes=32 * 1024 * 1024),
        cost_estimate=cost,
    )(lbl, x, w_cat, b_cat)

    s_logits = fused_logits[:B, :K]
    t_logits = fused_logits[:B, K_pad:K_pad + K]
    loss = jnp.sum(loss_parts[:, 0, 0]) / jnp.float32(B)
    return s_logits, t_logits, loss


def get_learnable_parameters(student_params, teacher_params, extra_params=()):
    """Mirror of BaseDistiller.get_learnable_parameters: count student vs extra
    learnable parameter scalars; teacher params are skipped (frozen)."""
    n_student = sum(int(p.size) for p in student_params)
    n_extra = sum(int(p.size) for p in extra_params)
    del teacher_params  # frozen, never counted
    return n_student, n_extra


if __name__ == "__main__":
    key = jax.random.PRNGKey(0)
    k_img, k_lbl, k_ws, k_bs, k_wt, k_bt = jax.random.split(key, 6)

    B, C, H, W = 2, 4, 16, 16
    K = 10            # number of classes
    D = C * H * W     # 1024

    image = jax.random.normal(k_img, (B, C, H, W), dtype=jnp.float32)
    label = jax.random.randint(k_lbl, (B,), 0, K, dtype=jnp.int32)

    # Deterministic synthetic parameters (student + teacher linear heads).
    ws = 0.02 * jax.random.normal(k_ws, (D, K), dtype=jnp.float32)
    bs = 0.02 * jax.random.normal(k_bs, (1, K), dtype=jnp.float32)
    wt = 0.02 * jax.random.normal(k_wt, (D, K), dtype=jnp.float32)
    bt = 0.02 * jax.random.normal(k_bt, (1, K), dtype=jnp.float32)

    s_logits, t_logits, loss = distiller_forward(
        image, label, ws, bs, wt, bt, num_classes=K)
    jax.block_until_ready((s_logits, t_logits, loss))

    # Reference with the same bf16 rounding of x / W (f32 accumulation).
    x = image.reshape(B, D)
    xf = x.astype(jnp.bfloat16).astype(jnp.float32)
    wsf = ws.astype(jnp.bfloat16).astype(jnp.float32)
    wtf = wt.astype(jnp.bfloat16).astype(jnp.float32)
    s_ref = xf @ wsf + bs
    t_ref = xf @ wtf + bt
    y = jax.nn.one_hot(label, K)
    ce_ref = -jnp.mean(jnp.sum(y * jax.nn.log_softmax(s_ref, -1), -1))
    T = TEMPERATURE
    pt = jax.nn.softmax(t_ref / T, -1)
    kd_ref = jnp.mean(jnp.sum(
        pt * (jax.nn.log_softmax(t_ref / T, -1) - jax.nn.log_softmax(s_ref / T, -1)),
        -1)) * T * T
    loss_ref = ce_ref + kd_ref

    assert jnp.allclose(s_logits, s_ref, atol=2e-3), "student logits mismatch"
    assert jnp.allclose(t_logits, t_ref, atol=2e-3), "teacher logits mismatch"
    # loss tolerance slightly looser: the KD softmax uses the EUP approx
    # reciprocal in-kernel (per perf review).
    assert jnp.allclose(loss, loss_ref, atol=4e-3), "loss mismatch"

    n_student, n_extra = get_learnable_parameters(
        student_params=(ws, bs), teacher_params=(wt, bt), extra_params=())
    assert n_student == D * K + K and n_extra == 0

    print("KERNEL_OK")
</pallas_src>

<mosaic_0001>
module attributes {stable_mosaic.version = 11 : i64} {
  func.func @_distiller_kernel(%arg0: i32, %arg1: memref<16x1xi32, #tpu.memory_space<vmem>>, %arg2: memref<16x1024xbf16, #tpu.memory_space<vmem>>, %arg3: memref<1024x256xbf16, #tpu.memory_space<vmem>>, %arg4: memref<1x256xf32, #tpu.memory_space<vmem>>, %arg5: memref<16x256xf32, #tpu.memory_space<vmem>>, %arg6: memref<1x8x128xf32, #tpu.memory_space<vmem>>) attributes {dimension_semantics = [#tpu.dimension_semantics<parallel>], iteration_bounds = array<i64: 1>, scalar_prefetch = 0 : i64, scratch_operands = 0 : i64, tpu.core_type = #tpu.core_type<tc>, window_params = [{transform_indices = @transform_0, window_bounds = array<i64: 16, 1>}, {transform_indices = @transform_1, window_bounds = array<i64: 16, 1024>}, {pipeline_mode = #tpu.pipeline_mode<synchronous>, transform_indices = @transform_2, window_bounds = array<i64: 1024, 256>}, {pipeline_mode = #tpu.pipeline_mode<synchronous>, transform_indices = @transform_3, window_bounds = array<i64: 1, 256>}, {transform_indices = @transform_4, window_bounds = array<i64: 16, 256>}, {transform_indices = @transform_5, window_bounds = array<i64: 1, 8, 128>}]} {
    %c0 = arith.constant 0 : index
    %c0_0 = arith.constant 0 : index
    %0 = vector.load %arg2[%c0, %c0_0] : memref<16x1024xbf16, #tpu.memory_space<vmem>>, vector<16x1024xbf16>
    %c0_1 = arith.constant 0 : index
    %c0_2 = arith.constant 0 : index
    %1 = vector.load %arg3[%c0_1, %c0_2] : memref<1024x256xbf16, #tpu.memory_space<vmem>>, vector<1024x256xbf16>
    %cst = arith.constant dense<0.000000e+00> : vector<16x256xf32>
    %2 = tpu.matmul %0, %1, %cst {dimension_numbers = #tpu.dot_dimension_numbers<[1], [0], [0], [1], [0, 0, 1, 1], [], []>} : vector<16x1024xbf16>, vector<1024x256xbf16>, vector<16x256xf32> -> vector<16x256xf32>
    %c0_3 = arith.constant 0 : index
    %c0_4 = arith.constant 0 : index
    %3 = vector.load %arg4[%c0_3, %c0_4] : memref<1x256xf32, #tpu.memory_space<vmem>>, vector<1x256xf32>
    %4 = vector.broadcast %3 : vector<1x256xf32> to vector<16x256xf32>
    %5 = arith.addf %2, %4 : vector<16x256xf32>
    %c0_5 = arith.constant 0 : index
    %c0_6 = arith.constant 0 : index
    %6 = vector.load %arg5[%c0_5, %c0_6] : memref<16x256xf32, #tpu.memory_space<vmem>>, vector<16x256xf32>
    tpu.vector_store %arg5[%c0_5, %c0_6], %5 {strides = array<i32>} : memref<16x256xf32, #tpu.memory_space<vmem>>, vector<16x256xf32>,
    %7 = vector.extract_strided_slice %5 {offsets = [0, 0], sizes = [16, 128], strides = [1, 1]} : vector<16x256xf32> to vector<16x128xf32>
    %8 = vector.extract_strided_slice %5 {offsets = [0, 128], sizes = [16, 128], strides = [1, 1]} : vector<16x256xf32> to vector<16x128xf32>
    %c0_7 = arith.constant 0 : index
    %c0_8 = arith.constant 0 : index
    %9 = vector.load %arg1[%c0_7, %c0_8] : memref<16x1xi32, #tpu.memory_space<vmem>>, vector<16x1xi32>
    %c0_i32 = arith.constant 0 : i32
    %10 = vector.broadcast %c0_i32 : i32 to vector<16x1xi32>
    %11 = arith.cmpi sge, %9, %10 : vector<16x1xi32>
    %12 = arith.extui %11 : vector<16x1xi1> to vector<16x1xi32>
    %13 = arith.sitofp %12 : vector<16x1xi32> to vector<16x1xf32>
    %14 = tpu.iota {dimensions = array<i32: 1>} : vector<16x128xi32>
    %cst_9 = arith.constant dense<0xFF800000> : vector<16xf32>
    %15 = vector.multi_reduction <maximumf>, %7, %cst_9 [1] : vector<16x128xf32> to vector<16xf32>
    %16 = vector.shape_cast %15 : vector<16xf32> to vector<16x1xf32>
    %17 = vector.broadcast %16 : vector<16x1xf32> to vector<16x128xf32>
    %18 = arith.subf %7, %17 : vector<16x128xf32>
    %19 = math.exp %18 : vector<16x128xf32>
    %cst_10 = arith.constant dense<0.000000e+00> : vector<16xf32>
    %20 = vector.multi_reduction <add>, %19, %cst_10 [1] : vector<16x128xf32> to vector<16xf32>
    %21 = vector.shape_cast %20 : vector<16xf32> to vector<16x1xf32>
    %22 = math.log %21 : vector<16x1xf32>
    %23 = vector.broadcast %9 : vector<16x1xi32> to vector<16x128xi32>
    %24 = arith.cmpi eq, %14, %23 : vector<16x128xi32>
    %25 = arith.extui %24 : vector<16x128xi1> to vector<16x128xi32>
    %26 = arith.sitofp %25 : vector<16x128xi32> to vector<16x128xf32>
    %27 = arith.mulf %26, %18 : vector<16x128xf32>
    %cst_11 = arith.constant dense<0.000000e+00> : vector<16xf32>
    %28 = vector.multi_reduction <add>, %27, %cst_11 [1] : vector<16x128xf32> to vector<16xf32>
    %29 = vector.shape_cast %28 : vector<16xf32> to vector<16x1xf32>
    %30 = arith.subf %22, %29 : vector<16x1xf32>
    %31 = arith.mulf %13, %30 : vector<16x1xf32>
    %32 = vector.shape_cast %31 : vector<16x1xf32> to vector<1x16x1xf32>
    %cst_12 = arith.constant dense<0.000000e+00> : vector<1xf32>
    %33 = vector.multi_reduction <add>, %32, %cst_12 [1, 2] : vector<1x16x1xf32> to vector<1xf32>
    %34 = vector.shape_cast %33 : vector<1xf32> to vector<1x1x1xf32>
    %35 = vector.extract %34[0, 0, 0] : f32 from vector<1x1x1xf32>
    %cst_13 = arith.constant 2.500000e-01 : f32
    %36 = vector.broadcast %cst_13 : f32 to vector<16x128xf32>
    %37 = arith.mulf %18, %36 : vector<16x128xf32>
    %cst_14 = arith.constant dense<0xFF800000> : vector<16xf32>
    %38 = vector.multi_reduction <maximumf>, %8, %cst_14 [1] : vector<16x128xf32> to vector<16xf32>
    %39 = vector.shape_cast %38 : vector<16xf32> to vector<16x1xf32>
    %40 = vector.broadcast %39 : vector<16x1xf32> to vector<16x128xf32>
    %41 = arith.subf %8, %40 : vector<16x128xf32>
    %cst_15 = arith.constant 2.500000e-01 : f32
    %42 = vector.broadcast %cst_15 : f32 to vector<16x128xf32>
    %43 = arith.mulf %41, %42 : vector<16x128xf32>
    %44 = math.exp %37 : vector<16x128xf32>
    %45 = math.exp %43 : vector<16x128xf32>
    %cst_16 = arith.constant dense<0.000000e+00> : vector<16xf32>
    %46 = vector.multi_reduction <add>, %44, %cst_16 [1] : vector<16x128xf32> to vector<16xf32>
    %47 = vector.shape_cast %46 : vector<16xf32> to vector<16x1xf32>
    %cst_17 = arith.constant dense<0.000000e+00> : vector<16xf32>
    %48 = vector.multi_reduction <add>, %45, %cst_17 [1] : vector<16x128xf32> to vector<16xf32>
    %49 = vector.shape_cast %48 : vector<16xf32> to vector<16x1xf32>
    %50 = math.log %47 : vector<16x1xf32>
    %51 = math.log %49 : vector<16x1xf32>
    %52 = tpu.reciprocal %49 {approx = true} : vector<16x1xf32> -> vector<16x1xf32>
    %53 = vector.broadcast %52 : vector<16x1xf32> to vector<16x128xf32>
    %54 = arith.mulf %45, %53 : vector<16x128xf32>
    %55 = arith.subf %43, %37 : vector<16x128xf32>
    %56 = arith.subf %50, %51 : vector<16x1xf32>
    %57 = vector.broadcast %56 : vector<16x1xf32> to vector<16x128xf32>
    %58 = arith.addf %55, %57 : vector<16x128xf32>
    %59 = arith.mulf %54, %58 : vector<16x128xf32>
    %cst_18 = arith.constant dense<0.000000e+00> : vector<16xf32>
    %60 = vector.multi_reduction <add>, %59, %cst_18 [1] : vector<16x128xf32> to vector<16xf32>
    %61 = vector.shape_cast %60 : vector<16xf32> to vector<16x1xf32>
    %62 = arith.mulf %13, %61 : vector<16x1xf32>
    %63 = vector.shape_cast %62 : vector<16x1xf32> to vector<1x16x1xf32>
    %cst_19 = arith.constant dense<0.000000e+00> : vector<1xf32>
    %64 = vector.multi_reduction <add>, %63, %cst_19 [1, 2] : vector<1x16x1xf32> to vector<1xf32>
    %65 = vector.shape_cast %64 : vector<1xf32> to vector<1x1x1xf32>
    %66 = vector.extract %65[0, 0, 0] : f32 from vector<1x1x1xf32>
    %cst_20 = arith.constant 1.600000e+01 : f32
    %67 = arith.mulf %66, %cst_20 : f32
    %68 = arith.addf %35, %67 : f32
    %69 = vector.broadcast %68 : f32 to vector<1x8x128xf32>
    %c0_21 = arith.constant 0 : index
    %c0_22 = arith.constant 0 : index
    %c0_23 = arith.constant 0 : index
    %70 = vector.load %arg6[%c0_21, %c0_22, %c0_23] : memref<1x8x128xf32, #tpu.memory_space<vmem>>, vector<1x8x128xf32>
    tpu.vector_store %arg6[%c0_21, %c0_22, %c0_23], %69 {strides = array<i32>} : memref<1x8x128xf32, #tpu.memory_space<vmem>>, vector<1x8x128xf32>,
    return
  }
  func.func @transform_0(%arg0: i32) -> (i32, i32) {
    %c0_i32 = arith.constant 0 : i32
    %c0_i32_0 = arith.constant 0 : i32
    return %arg0, %c0_i32 : i32, i32
  }
  func.func @transform_1(%arg0: i32) -> (i32, i32) {
    %c0_i32 = arith.constant 0 : i32
    %c0_i32_0 = arith.constant 0 : i32
    return %arg0, %c0_i32 : i32, i32
  }
  func.func @transform_2(%arg0: i32) -> (i32, i32) {
    %c0_i32 = arith.constant 0 : i32
    %c0_i32_0 = arith.constant 0 : i32
    %c0_i32_1 = arith.constant 0 : i32
    return %c0_i32, %c0_i32_0 : i32, i32
  }
  func.func @transform_3(%arg0: i32) -> (i32, i32) {
    %c0_i32 = arith.constant 0 : i32
    %c0_i32_0 = arith.constant 0 : i32
    %c0_i32_1 = arith.constant 0 : i32
    return %c0_i32, %c0_i32_0 : i32, i32
  }
  func.func @transform_4(%arg0: i32) -> (i32, i32) {
    %c0_i32 = arith.constant 0 : i32
    %c0_i32_0 = arith.constant 0 : i32
    return %arg0, %c0_i32 : i32, i32
  }
  func.func @transform_5(%arg0: i32) -> (i32, i32, i32) {
    %c0_i32 = arith.constant 0 : i32
    %c0_i32_0 = arith.constant 0 : i32
    %c0_i32_1 = arith.constant 0 : i32
    return %arg0, %c0_i32, %c0_i32_0 : i32, i32, i32
  }
}

</mosaic_0001>

<llo_original>
// kernel: distiller_forward.1
$region0: #{distiller_forward.1}
  #allocation0 [shape = 'u32[]', space=smem, size = 0x4, offset = 0x4, fixed_abs, tag = 'smem constant byte address 0x4 - core index']
  #allocation1 [shape = 'u32[144,128]{1,0:T(1,128)}', space=vmem, size = 0x12000, scoped, tag = 'internal scratch']
  %s0 = inlined_call_operand.vmem [shape: s32[16,1], index: 0, kind: input, shape index: {}]
  %s1 = inlined_call_operand.vmem [shape: bf16[16,1024], index: 1, kind: input, shape index: {}]
  %s2 = inlined_call_operand.vmem [shape: bf16[1024,256], index: 2, kind: input, shape index: {}]
  %s3 = inlined_call_operand.vmem [shape: f32[1,256], index: 3, kind: input, shape index: {}]
  %s4 = inlined_call_operand.vmem [shape: f32[16,256], index: 4, kind: output, shape index: {0}]
  %s5 = inlined_call_operand.vmem [shape: f32[1,8,128], index: 5, kind: output, shape index: {1}]
  %6 = xla_tuple %s4, %s5
  %s7 = sld [smem:[#allocation0]]
  $region34: #{distiller_forward.1} parent=0
    _
  %s9 = ssub.s32 1, %s7
  %s10 = scalar_select 0, %s9, %s7
  // Predicated region
  $region2: #{distiller_forward.1} parent=0 // pred_check
    _
  $region3: #{distiller_forward.1} parent=0 // pred_check_branch
    %12 = sbr.rel (0) target = $region5
  $region4: #{distiller_forward.1} parent=0 // pred_region
    _
  $region5: #{distiller_forward.1} parent=0 // pred_fallthru
    _
  // Predicated region
  $region6: #{distiller_forward.1} parent=0 // pred_check
    _
  $region7: #{distiller_forward.1} parent=0 // pred_check_branch
    %14 = sbr.rel (0) target = $region9
  $region8: #{distiller_forward.1} parent=0 // pred_region
    _
  $region9: #{distiller_forward.1} parent=0 // pred_fallthru
    _
  // Predicated region
  $region10: #{distiller_forward.1} parent=0 // pred_check
    _
  $region11: #{distiller_forward.1} parent=0 // pred_check_branch
    %16 = sbr.rel (0) target = $region13
  $region12: #{distiller_forward.1} parent=0 // pred_region
    _
  $region13: #{distiller_forward.1} parent=0 // pred_fallthru
    _
  // Predicated region
  $region14: #{distiller_forward.1} parent=0 // pred_check
    _
  $region15: #{distiller_forward.1} parent=0 // pred_check_branch
    %18 = sbr.rel (0) target = $region17
  $region16: #{distiller_forward.1} parent=0 // pred_region
    _
  $region17: #{distiller_forward.1} parent=0 // pred_fallthru
    _
  %v19 = vld [vmem:[%s1] sm:$0xff]
  %v20 = vld [vmem:[%s1 + $0x8] sm:$0xff]
  %v21 = vld [vmem:[%s1 + $0x10] sm:$0xff]
  %v22 = vld [vmem:[%s1 + $0x18] sm:$0xff]
  %v23 = vld [vmem:[%s1 + $0x20] sm:$0xff]
  %v24 = vld [vmem:[%s1 + $0x28] sm:$0xff]
  %v25 = vld [vmem:[%s1 + $0x30] sm:$0xff]
  %v26 = vld [vmem:[%s1 + $0x38] sm:$0xff]
  %v27 = vld [vmem:[%s2] sm:$0xff]
  %v28 = vld [vmem:[%s2 + $0x8] sm:$0xff]
  %v29 = vld [vmem:[%s2 + $0x10] sm:$0xff]
  %v30 = vld [vmem:[%s2 + $0x18] sm:$0xff]
  %v31 = vld [vmem:[%s2 + $0x20] sm:$0xff]
  %v32 = vld [vmem:[%s2 + $0x28] sm:$0xff]
  %v33 = vld [vmem:[%s2 + $0x30] sm:$0xff]
  %v34 = vld [vmem:[%s2 + $0x38] sm:$0xff]
  %v35 = vld [vmem:[%s2 + $0x40] sm:$0xff]
  %v36 = vld [vmem:[%s2 + $0x48] sm:$0xff]
  %v37 = vld [vmem:[%s2 + $0x50] sm:$0xff]
  %v38 = vld [vmem:[%s2 + $0x58] sm:$0xff]
  %v39 = vld [vmem:[%s2 + $0x60] sm:$0xff]
  %v40 = vld [vmem:[%s2 + $0x68] sm:$0xff]
  %v41 = vld [vmem:[%s2 + $0x70] sm:$0xff]
  %v42 = vld [vmem:[%s2 + $0x78] sm:$0xff]
  %v43 = vld [vmem:[%s2 + $0x80] sm:$0xff]
  %v44 = vld [vmem:[%s2 + $0x88] sm:$0xff]
  %v45 = vld [vmem:[%s2 + $0x90] sm:$0xff]
  %v46 = vld [vmem:[%s2 + $0x98] sm:$0xff]
  %v47 = vld [vmem:[%s2 + $0xa0] sm:$0xff]
  %v48 = vld [vmem:[%s2 + $0xa8] sm:$0xff]
  %v49 = vld [vmem:[%s2 + $0xb0] sm:$0xff]
  %v50 = vld [vmem:[%s2 + $0xb8] sm:$0xff]
  %v51 = vld [vmem:[%s2 + $0xc0] sm:$0xff]
  %v52 = vld [vmem:[%s2 + $0xc8] sm:$0xff]
  %v53 = vld [vmem:[%s2 + $0xd0] sm:$0xff]
  %v54 = vld [vmem:[%s2 + $0xd8] sm:$0xff]
  %v55 = vld [vmem:[%s2 + $0xe0] sm:$0xff]
  %v56 = vld [vmem:[%s2 + $0xe8] sm:$0xff]
  %v57 = vld [vmem:[%s2 + $0xf0] sm:$0xff]
  %v58 = vld [vmem:[%s2 + $0xf8] sm:$0xff]
  %v59 = vld [vmem:[%s2 + $0x100] sm:$0xff]
  %v60 = vld [vmem:[%s2 + $0x108] sm:$0xff]
  %v61 = vld [vmem:[%s2 + $0x110] sm:$0xff]
  %v62 = vld [vmem:[%s2 + $0x118] sm:$0xff]
  %v63 = vld [vmem:[%s2 + $0x120] sm:$0xff]
  %v64 = vld [vmem:[%s2 + $0x128] sm:$0xff]
  %v65 = vld [vmem:[%s2 + $0x130] sm:$0xff]
  %v66 = vld [vmem:[%s2 + $0x138] sm:$0xff]
  %v67 = vld [vmem:[%s2 + $0x140] sm:$0xff]
  %v68 = vld [vmem:[%s2 + $0x148] sm:$0xff]
  %v69 = vld [vmem:[%s2 + $0x150] sm:$0xff]
  %v70 = vld [vmem:[%s2 + $0x158] sm:$0xff]
  %v71 = vld [vmem:[%s2 + $0x160] sm:$0xff]
  %v72 = vld [vmem:[%s2 + $0x168] sm:$0xff]
  %v73 = vld [vmem:[%s2 + $0x170] sm:$0xff]
  %v74 = vld [vmem:[%s2 + $0x178] sm:$0xff]
  %v75 = vld [vmem:[%s2 + $0x180] sm:$0xff]
  %v76 = vld [vmem:[%s2 + $0x188] sm:$0xff]
  %v77 = vld [vmem:[%s2 + $0x190] sm:$0xff]
  %v78 = vld [vmem:[%s2 + $0x198] sm:$0xff]
  %v79 = vld [vmem:[%s2 + $0x1a0] sm:$0xff]
  %v80 = vld [vmem:[%s2 + $0x1a8] sm:$0xff]
  %v81 = vld [vmem:[%s2 + $0x1b0] sm:$0xff]
  %v82 = vld [vmem:[%s2 + $0x1b8] sm:$0xff]
  %v83 = vld [vmem:[%s2 + $0x1c0] sm:$0xff]
  %v84 = vld [vmem:[%s2 + $0x1c8] sm:$0xff]
  %v85 = vld [vmem:[%s2 + $0x1d0] sm:$0xff]
  %v86 = vld [vmem:[%s2 + $0x1d8] sm:$0xff]
  %v87 = vld [vmem:[%s2 + $0x1e0] sm:$0xff]
  %v88 = vld [vmem:[%s2 + $0x1e8] sm:$0xff]
  %v89 = vld [vmem:[%s2 + $0x1f0] sm:$0xff]
  %v90 = vld [vmem:[%s2 + $0x1f8] sm:$0xff]
  %v91 = vld [vmem:[%s2 + $0x200] sm:$0xff]
  %v92 = vld [vmem:[%s2 + $0x208] sm:$0xff]
  %v93 = vld [vmem:[%s2 + $0x210] sm:$0xff]
  %v94 = vld [vmem:[%s2 + $0x218] sm:$0xff]
  %v95 = vld [vmem:[%s2 + $0x220] sm:$0xff]
  %v96 = vld [vmem:[%s2 + $0x228] sm:$0xff]
  %v97 = vld [vmem:[%s2 + $0x230] sm:$0xff]
  %v98 = vld [vmem:[%s2 + $0x238] sm:$0xff]
  %v99 = vld [vmem:[%s2 + $0x240] sm:$0xff]
  %v100 = vld [vmem:[%s2 + $0x248] sm:$0xff]
  %v101 = vld [vmem:[%s2 + $0x250] sm:$0xff]
  %v102 = vld [vmem:[%s2 + $0x258] sm:$0xff]
  %v103 = vld [vmem:[%s2 + $0x260] sm:$0xff]
  %v104 = vld [vmem:[%s2 + $0x268] sm:$0xff]
  %v105 = vld [vmem:[%s2 + $0x270] sm:$0xff]
  %v106 = vld [vmem:[%s2 + $0x278] sm:$0xff]
  %v107 = vld [vmem:[%s2 + $0x280] sm:$0xff]
  %v108 = vld [vmem:[%s2 + $0x288] sm:$0xff]
  %v109 = vld [vmem:[%s2 + $0x290] sm:$0xff]
  %v110 = vld [vmem:[%s2 + $0x298] sm:$0xff]
  %v111 = vld [vmem:[%s2 + $0x2a0] sm:$0xff]
  %v112 = vld [vmem:[%s2 + $0x2a8] sm:$0xff]
  %v113 = vld [vmem:[%s2 + $0x2b0] sm:$0xff]
  %v114 = vld [vmem:[%s2 + $0x2b8] sm:$0xff]
  %v115 = vld [vmem:[%s2 + $0x2c0] sm:$0xff]
  %v116 = vld [vmem:[%s2 + $0x2c8] sm:$0xff]
  %v117 = vld [vmem:[%s2 + $0x2d0] sm:$0xff]
  %v118 = vld [vmem:[%s2 + $0x2d8] sm:$0xff]
  %v119 = vld [vmem:[%s2 + $0x2e0] sm:$0xff]
  %v120 = vld [vmem:[%s2 + $0x2e8] sm:$0xff]
  %v121 = vld [vmem:[%s2 + $0x2f0] sm:$0xff]
  %v122 = vld [vmem:[%s2 + $0x2f8] sm:$0xff]
  %v123 = vld [vmem:[%s2 + $0x300] sm:$0xff]
  %v124 = vld [vmem:[%s2 + $0x308] sm:$0xff]
  %v125 = vld [vmem:[%s2 + $0x310] sm:$0xff]
  %v126 = vld [vmem:[%s2 + $0x318] sm:$0xff]
  %v127 = vld [vmem:[%s2 + $0x320] sm:$0xff]
  %v128 = vld [vmem:[%s2 + $0x328] sm:$0xff]
  %v129 = vld [vmem:[%s2 + $0x330] sm:$0xff]
  %v130 = vld [vmem:[%s2 + $0x338] sm:$0xff]
  %v131 = vld [vmem:[%s2 + $0x340] sm:$0xff]
  %v132 = vld [vmem:[%s2 + $0x348] sm:$0xff]
  %v133 = vld [vmem:[%s2 + $0x350] sm:$0xff]
  %v134 = vld [vmem:[%s2 + $0x358] sm:$0xff]
  %v135 = vld [vmem:[%s2 + $0x360] sm:$0xff]
  %v136 = vld [vmem:[%s2 + $0x368] sm:$0xff]
  %v137 = vld [vmem:[%s2 + $0x370] sm:$0xff]
  %v138 = vld [vmem:[%s2 + $0x378] sm:$0xff]
  %v139 = vld [vmem:[%s2 + $0x380] sm:$0xff]
  %v140 = vld [vmem:[%s2 + $0x388] sm:$0xff]
  %v141 = vld [vmem:[%s2 + $0x390] sm:$0xff]
  %v142 = vld [vmem:[%s2 + $0x398] sm:$0xff]
  %v143 = vld [vmem:[%s2 + $0x3a0] sm:$0xff]
  %v144 = vld [vmem:[%s2 + $0x3a8] sm:$0xff]
  %v145 = vld [vmem:[%s2 + $0x3b0] sm:$0xff]
  %v146 = vld [vmem:[%s2 + $0x3b8] sm:$0xff]
  %v147 = vld [vmem:[%s2 + $0x3c0] sm:$0xff]
  %v148 = vld [vmem:[%s2 + $0x3c8] sm:$0xff]
  %v149 = vld [vmem:[%s2 + $0x3d0] sm:$0xff]
  %v150 = vld [vmem:[%s2 + $0x3d8] sm:$0xff]
  %v151 = vld [vmem:[%s2 + $0x3e0] sm:$0xff]
  %v152 = vld [vmem:[%s2 + $0x3e8] sm:$0xff]
  %v153 = vld [vmem:[%s2 + $0x3f0] sm:$0xff]
  %v154 = vld [vmem:[%s2 + $0x3f8] sm:$0xff]
  %v155 = vld [vmem:[%s3] sm:$0x3]
  %v157 = vlaneseq
  %v158 = vshrl.u32 %v157, 7
  %v159 = vsub.s32 0, %v158
  %v160 = vrot.slane %v155, %v159
  %v161 = vlaneseq
  %v162 = vshrl.u32 %v161, 7
  %v163 = vsub.s32 1, %v162
  %v164 = vrot.slane %v155, %v163
  %v175 = vunpack.c.l.b16 %v19
  %v176 = vunpack.c.h.b16 %v19
  %v177 = vunpack.c.l.b16 %v20
  %v178 = vunpack.c.h.b16 %v20
  %v179 = vunpack.c.l.b16 %v21
  %v180 = vunpack.c.h.b16 %v21
  %v181 = vunpack.c.l.b16 %v22
  %v182 = vunpack.c.h.b16 %v22
  %v183 = vunpack.c.l.b16 %v23
  %v184 = vunpack.c.h.b16 %v23
  %v185 = vunpack.c.l.b16 %v24
  %v186 = vunpack.c.h.b16 %v24
  %v187 = vunpack.c.l.b16 %v25
  %v188 = vunpack.c.h.b16 %v25
  %v189 = vunpack.c.l.b16 %v26
  %v190 = vunpack.c.h.b16 %v26
  %v191 = vpack.c.b16 %v183, %v175
  %v192 = vpack.c.b16 %v184, %v176
  %v193 = vpack.c.b16 %v185, %v177
  %v194 = vpack.c.b16 %v186, %v178
  %v195 = vpack.c.b16 %v187, %v179
  %v196 = vpack.c.b16 %v188, %v180
  %v197 = vpack.c.b16 %v189, %v181
  %v198 = vpack.c.b16 %v190, %v182
  %v335 = vunpack.c.l.b16 %v27
  %v336 = vunpack.c.h.b16 %v27
  %v337 = vunpack.c.l.b16 %v28
  %v338 = vunpack.c.h.b16 %v28
  %v339 = vunpack.c.l.b16 %v29
  %v340 = vunpack.c.h.b16 %v29
  %v341 = vunpack.c.l.b16 %v30
  %v342 = vunpack.c.h.b16 %v30
  %v343 = vunpack.c.l.b16 %v31
  %v344 = vunpack.c.h.b16 %v31
  %v345 = vunpack.c.l.b16 %v32
  %v346 = vunpack.c.h.b16 %v32
  %v347 = vunpack.c.l.b16 %v33
  %v348 = vunpack.c.h.b16 %v33
  %v349 = vunpack.c.l.b16 %v34
  %v350 = vunpack.c.h.b16 %v34
  %v351 = vunpack.c.l.b16 %v35
  %v352 = vunpack.c.h.b16 %v35
  %v353 = vunpack.c.l.b16 %v36
  %v354 = vunpack.c.h.b16 %v36
  %v355 = vunpack.c.l.b16 %v37
  %v356 = vunpack.c.h.b16 %v37
  %v357 = vunpack.c.l.b16 %v38
  %v358 = vunpack.c.h.b16 %v38
  %v359 = vunpack.c.l.b16 %v39
  %v360 = vunpack.c.h.b16 %v39
  %v361 = vunpack.c.l.b16 %v40
  %v362 = vunpack.c.h.b16 %v40
  %v363 = vunpack.c.l.b16 %v41
  %v364 = vunpack.c.h.b16 %v41
  %v365 = vunpack.c.l.b16 %v42
  %v366 = vunpack.c.h.b16 %v42
  %v367 = vunpack.c.l.b16 %v43
  %v368 = vunpack.c.h.b16 %v43
  %v369 = vunpack.c.l.b16 %v44
  %v370 = vunpack.c.h.b16 %v44
  %v371 = vunpack.c.l.b16 %v45
  %v372 = vunpack.c.h.b16 %v45
  %v373 = vunpack.c.l.b16 %v46
  %v374 = vunpack.c.h.b16 %v46
  %v375 = vunpack.c.l.b16 %v47
  %v376 = vunpack.c.h.b16 %v47
  %v377 = vunpack.c.l.b16 %v48
  %v378 = vunpack.c.h.b16 %v48
  %v379 = vunpack.c.l.b16 %v49
  %v380 = vunpack.c.h.b16 %v49
  %v381 = vunpack.c.l.b16 %v50
  %v382 = vunpack.c.h.b16 %v50
  %v383 = vunpack.c.l.b16 %v51
  %v384 = vunpack.c.h.b16 %v51
  %v385 = vunpack.c.l.b16 %v52
  %v386 = vunpack.c.h.b16 %v52
  %v387 = vunpack.c.l.b16 %v53
  %v388 = vunpack.c.h.b16 %v53
  %v389 = vunpack.c.l.b16 %v54
  %v390 = vunpack.c.h.b16 %v54
  %v391 = vunpack.c.l.b16 %v55
  %v392 = vunpack.c.h.b16 %v55
  %v393 = vunpack.c.l.b16 %v56
  %v394 = vunpack.c.h.b16 %v56
  %v395 = vunpack.c.l.b16 %v57
  %v396 = vunpack.c.h.b16 %v57
  %v397 = vunpack.c.l.b16 %v58
  %v398 = vunpack.c.h.b16 %v58
  %v399 = vunpack.c.l.b16 %v59
  %v400 = vunpack.c.h.b16 %v59
  %v401 = vunpack.c.l.b16 %v60
  %v402 = vunpack.c.h.b16 %v60
  %v403 = vunpack.c.l.b16 %v61
  %v404 = vunpack.c.h.b16 %v61
  %v405 = vunpack.c.l.b16 %v62
  %v406 = vunpack.c.h.b16 %v62
  %v407 = vunpack.c.l.b16 %v63
  %v408 = vunpack.c.h.b16 %v63
  %v409 = vunpack.c.l.b16 %v64
  %v410 = vunpack.c.h.b16 %v64
  %v411 = vunpack.c.l.b16 %v65
  %v412 = vunpack.c.h.b16 %v65
  %v413 = vunpack.c.l.b16 %v66
  %v414 = vunpack.c.h.b16 %v66
  %v415 = vunpack.c.l.b16 %v67
  %v416 = vunpack.c.h.b16 %v67
  %v417 = vunpack.c.l.b16 %v68
  %v418 = vunpack.c.h.b16 %v68
  %v419 = vunpack.c.l.b16 %v69
  %v420 = vunpack.c.h.b16 %v69
  %v421 = vunpack.c.l.b16 %v70
  %v422 = vunpack.c.h.b16 %v70
  %v423 = vunpack.c.l.b16 %v71
  %v424 = vunpack.c.h.b16 %v71
  %v425 = vunpack.c.l.b16 %v72
  %v426 = vunpack.c.h.b16 %v72
  %v427 = vunpack.c.l.b16 %v73
  %v428 = vunpack.c.h.b16 %v73
  %v429 = vunpack.c.l.b16 %v74
  %v430 = vunpack.c.h.b16 %v74
  %v431 = vunpack.c.l.b16 %v75
  %v432 = vunpack.c.h.b16 %v75
  %v433 = vunpack.c.l.b16 %v76
  %v434 = vunpack.c.h.b16 %v76
  %v435 = vunpack.c.l.b16 %v77
  %v436 = vunpack.c.h.b16 %v77
  %v437 = vunpack.c.l.b16 %v78
  %v438 = vunpack.c.h.b16 %v78
  %v439 = vunpack.c.l.b16 %v79
  %v440 = vunpack.c.h.b16 %v79
  %v441 = vunpack.c.l.b16 %v80
  %v442 = vunpack.c.h.b16 %v80
  %v443 = vunpack.c.l.b16 %v81
  %v444 = vunpack.c.h.b16 %v81
  %v445 = vunpack.c.l.b16 %v82
  %v446 = vunpack.c.h.b16 %v82
  %v447 = vunpack.c.l.b16 %v83
  %v448 = vunpack.c.h.b16 %v83
  %v449 = vunpack.c.l.b16 %v84
  %v450 = vunpack.c.h.b16 %v84
  %v451 = vunpack.c.l.b16 %v85
  %v452 = vunpack.c.h.b16 %v85
  %v453 = vunpack.c.l.b16 %v86
  %v454 = vunpack.c.h.b16 %v86
  %v455 = vunpack.c.l.b16 %v87
  %v456 = vunpack.c.h.b16 %v87
  %v457 = vunpack.c.l.b16 %v88
  %v458 = vunpack.c.h.b16 %v88
  %v459 = vunpack.c.l.b16 %v89
  %v460 = vunpack.c.h.b16 %v89
  %v461 = vunpack.c.l.b16 %v90
  %v462 = vunpack.c.h.b16 %v90
  %v463 = vunpack.c.l.b16 %v91
  %v464 = vunpack.c.h.b16 %v91
  %v465 = vunpack.c.l.b16 %v92
  %v466 = vunpack.c.h.b16 %v92
  %v467 = vunpack.c.l.b16 %v93
  %v468 = vunpack.c.h.b16 %v93
  %v469 = vunpack.c.l.b16 %v94
  %v470 = vunpack.c.h.b16 %v94
  %v471 = vunpack.c.l.b16 %v95
  %v472 = vunpack.c.h.b16 %v95
  %v473 = vunpack.c.l.b16 %v96
  %v474 = vunpack.c.h.b16 %v96
  %v475 = vunpack.c.l.b16 %v97
  %v476 = vunpack.c.h.b16 %v97
  %v477 = vunpack.c.l.b16 %v98
  %v478 = vunpack.c.h.b16 %v98
  %v479 = vunpack.c.l.b16 %v99
  %v480 = vunpack.c.h.b16 %v99
  %v481 = vunpack.c.l.b16 %v100
  %v482 = vunpack.c.h.b16 %v100
  %v483 = vunpack.c.l.b16 %v101
  %v484 = vunpack.c.h.b16 %v101
  %v485 = vunpack.c.l.b16 %v102
  %v486 = vunpack.c.h.b16 %v102
  %v487 = vunpack.c.l.b16 %v103
  %v488 = vunpack.c.h.b16 %v103
  %v489 = vunpack.c.l.b16 %v104
  %v490 = vunpack.c.h.b16 %v104
  %v491 = vunpack.c.l.b16 %v105
  %v492 = vunpack.c.h.b16 %v105
  %v493 = vunpack.c.l.b16 %v106
  %v494 = vunpack.c.h.b16 %v106
  %v495 = vunpack.c.l.b16 %v107
  %v496 = vunpack.c.h.b16 %v107
  %v497 = vunpack.c.l.b16 %v108
  %v498 = vunpack.c.h.b16 %v108
  %v499 = vunpack.c.l.b16 %v109
  %v500 = vunpack.c.h.b16 %v109
  %v501 = vunpack.c.l.b16 %v110
  %v502 = vunpack.c.h.b16 %v110
  %v503 = vunpack.c.l.b16 %v111
  %v504 = vunpack.c.h.b16 %v111
  %v505 = vunpack.c.l.b16 %v112
  %v506 = vunpack.c.h.b16 %v112
  %v507 = vunpack.c.l.b16 %v113
  %v508 = vunpack.c.h.b16 %v113
  %v509 = vunpack.c.l.b16 %v114
  %v510 = vunpack.c.h.b16 %v114
  %v511 = vunpack.c.l.b16 %v115
  %v512 = vunpack.c.h.b16 %v115
  %v513 = vunpack.c.l.b16 %v116
  %v514 = vunpack.c.h.b16 %v116
  %v515 = vunpack.c.l.b16 %v117
  %v516 = vunpack.c.h.b16 %v117
  %v517 = vunpack.c.l.b16 %v118
  %v518 = vunpack.c.h.b16 %v118
  %v519 = vunpack.c.l.b16 %v119
  %v520 = vunpack.c.h.b16 %v119
  %v521 = vunpack.c.l.b16 %v120
  %v522 = vunpack.c.h.b16 %v120
  %v523 = vunpack.c.l.b16 %v121
  %v524 = vunpack.c.h.b16 %v121
  %v525 = vunpack.c.l.b16 %v122
  %v526 = vunpack.c.h.b16 %v122
  %v527 = vunpack.c.l.b16 %v123
  %v528 = vunpack.c.h.b16 %v123
  %v529 = vunpack.c.l.b16 %v124
  %v530 = vunpack.c.h.b16 %v124
  %v531 = vunpack.c.l.b16 %v125
  %v532 = vunpack.c.h.b16 %v125
  %v533 = vunpack.c.l.b16 %v126
  %v534 = vunpack.c.h.b16 %v126
  %v535 = vunpack.c.l.b16 %v127
  %v536 = vunpack.c.h.b16 %v127
  %v537 = vunpack.c.l.b16 %v128
  %v538 = vunpack.c.h.b16 %v128
  %v539 = vunpack.c.l.b16 %v129
  %v540 = vunpack.c.h.b16 %v129
  %v541 = vunpack.c.l.b16 %v130
  %v542 = vunpack.c.h.b16 %v130
  %v543 = vunpack.c.l.b16 %v131
  %v544 = vunpack.c.h.b16 %v131
  %v545 = vunpack.c.l.b16 %v132
  %v546 = vunpack.c.h.b16 %v132
  %v547 = vunpack.c.l.b16 %v133
  %v548 = vunpack.c.h.b16 %v133
  %v549 = vunpack.c.l.b16 %v134
  %v550 = vunpack.c.h.b16 %v134
  %v551 = vunpack.c.l.b16 %v135
  %v552 = vunpack.c.h.b16 %v135
  %v553 = vunpack.c.l.b16 %v136
  %v554 = vunpack.c.h.b16 %v136
  %v555 = vunpack.c.l.b16 %v137
  %v556 = vunpack.c.h.b16 %v137
  %v557 = vunpack.c.l.b16 %v138
  %v558 = vunpack.c.h.b16 %v138
  %v559 = vunpack.c.l.b16 %v139
  %v560 = vunpack.c.h.b16 %v139
  %v561 = vunpack.c.l.b16 %v140
  %v562 = vunpack.c.h.b16 %v140
  %v563 = vunpack.c.l.b16 %v141
  %v564 = vunpack.c.h.b16 %v141
  %v565 = vunpack.c.l.b16 %v142
  %v566 = vunpack.c.h.b16 %v142
  %v567 = vunpack.c.l.b16 %v143
  %v568 = vunpack.c.h.b16 %v143
  %v569 = vunpack.c.l.b16 %v144
  %v570 = vunpack.c.h.b16 %v144
  %v571 = vunpack.c.l.b16 %v145
  %v572 = vunpack.c.h.b16 %v145
  %v573 = vunpack.c.l.b16 %v146
  %v574 = vunpack.c.h.b16 %v146
  %v575 = vunpack.c.l.b16 %v147
  %v576 = vunpack.c.h.b16 %v147
  %v577 = vunpack.c.l.b16 %v148
  %v578 = vunpack.c.h.b16 %v148
  %v579 = vunpack.c.l.b16 %v149
  %v580 = vunpack.c.h.b16 %v149
  %v581 = vunpack.c.l.b16 %v150
  %v582 = vunpack.c.h.b16 %v150
  %v583 = vunpack.c.l.b16 %v151
  %v584 = vunpack.c.h.b16 %v151
  %v585 = vunpack.c.l.b16 %v152
  %v586 = vunpack.c.h.b16 %v152
  %v587 = vunpack.c.l.b16 %v153
  %v588 = vunpack.c.h.b16 %v153
  %v589 = vunpack.c.l.b16 %v154
  %v590 = vunpack.c.h.b16 %v154
  %v591 = vpack.c.b16 %v337, %v335
  %v592 = vpack.c.b16 %v338, %v336
  %v593 = vpack.c.b16 %v341, %v339
  %v594 = vpack.c.b16 %v342, %v340
  %v595 = vpack.c.b16 %v345, %v343
  %v596 = vpack.c.b16 %v346, %v344
  %v597 = vpack.c.b16 %v349, %v347
  %v598 = vpack.c.b16 %v350, %v348
  %v599 = vpack.c.b16 %v353, %v351
  %v600 = vpack.c.b16 %v354, %v352
  %v601 = vpack.c.b16 %v357, %v355
  %v602 = vpack.c.b16 %v358, %v356
  %v603 = vpack.c.b16 %v361, %v359
  %v604 = vpack.c.b16 %v362, %v360
  %v605 = vpack.c.b16 %v365, %v363
  %v606 = vpack.c.b16 %v366, %v364
  %v607 = vpack.c.b16 %v369, %v367
  %v608 = vpack.c.b16 %v370, %v368
  %v609 = vpack.c.b16 %v373, %v371
  %v610 = vpack.c.b16 %v374, %v372
  %v611 = vpack.c.b16 %v377, %v375
  %v612 = vpack.c.b16 %v378, %v376
  %v613 = vpack.c.b16 %v381, %v379
  %v614 = vpack.c.b16 %v382, %v380
  %v615 = vpack.c.b16 %v385, %v383
  %v616 = vpack.c.b16 %v386, %v384
  %v617 = vpack.c.b16 %v389, %v387
  %v618 = vpack.c.b16 %v390, %v388
  %v619 = vpack.c.b16 %v393, %v391
  %v620 = vpack.c.b16 %v394, %v392
  %v621 = vpack.c.b16 %v397, %v395
  %v622 = vpack.c.b16 %v398, %v396
  %v623 = vpack.c.b16 %v401, %v399
  %v624 = vpack.c.b16 %v402, %v400
  %v625 = vpack.c.b16 %v405, %v403
  %v626 = vpack.c.b16 %v406, %v404
  %v627 = vpack.c.b16 %v409, %v407
  %v628 = vpack.c.b16 %v410, %v408
  %v629 = vpack.c.b16 %v413, %v411
  %v630 = vpack.c.b16 %v414, %v412
  %v631 = vpack.c.b16 %v417, %v415
  %v632 = vpack.c.b16 %v418, %v416
  %v633 = vpack.c.b16 %v421, %v419
  %v634 = vpack.c.b16 %v422, %v420
  %v635 = vpack.c.b16 %v425, %v423
  %v636 = vpack.c.b16 %v426, %v424
  %v637 = vpack.c.b16 %v429, %v427
  %v638 = vpack.c.b16 %v430, %v428
  %v639 = vpack.c.b16 %v433, %v431
  %v640 = vpack.c.b16 %v434, %v432
  %v641 = vpack.c.b16 %v437, %v435
  %v642 = vpack.c.b16 %v438, %v436
  %v643 = vpack.c.b16 %v441, %v439
  %v644 = vpack.c.b16 %v442, %v440
  %v645 = vpack.c.b16 %v445, %v443
  %v646 = vpack.c.b16 %v446, %v444
  %v647 = vpack.c.b16 %v449, %v447
  %v648 = vpack.c.b16 %v450, %v448
  %v649 = vpack.c.b16 %v453, %v451
  %v650 = vpack.c.b16 %v454, %v452
  %v651 = vpack.c.b16 %v457, %v455
  %v652 = vpack.c.b16 %v458, %v456
  %v653 = vpack.c.b16 %v461, %v459
  %v654 = vpack.c.b16 %v462, %v460
  %v655 = vpack.c.b16 %v465, %v463
  %v656 = vpack.c.b16 %v466, %v464
  %v657 = vpack.c.b16 %v469, %v467
  %v658 = vpack.c.b16 %v470, %v468
  %v659 = vpack.c.b16 %v473, %v471
  %v660 = vpack.c.b16 %v474, %v472
  %v661 = vpack.c.b16 %v477, %v475
  %v662 = vpack.c.b16 %v478, %v476
  %v663 = vpack.c.b16 %v481, %v479
  %v664 = vpack.c.b16 %v482, %v480
  %v665 = vpack.c.b16 %v485, %v483
  %v666 = vpack.c.b16 %v486, %v484
  %v667 = vpack.c.b16 %v489, %v487
  %v668 = vpack.c.b16 %v490, %v488
  %v669 = vpack.c.b16 %v493, %v491
  %v670 = vpack.c.b16 %v494, %v492
  %v671 = vpack.c.b16 %v497, %v495
  %v672 = vpack.c.b16 %v498, %v496
  %v673 = vpack.c.b16 %v501, %v499
  %v674 = vpack.c.b16 %v502, %v500
  %v675 = vpack.c.b16 %v505, %v503
  %v676 = vpack.c.b16 %v506, %v504
  %v677 = vpack.c.b16 %v509, %v507
  %v678 = vpack.c.b16 %v510, %v508
  %v679 = vpack.c.b16 %v513, %v511
  %v680 = vpack.c.b16 %v514, %v512
  %v681 = vpack.c.b16 %v517, %v515
  %v682 = vpack.c.b16 %v518, %v516
  %v683 = vpack.c.b16 %v521, %v519
  %v684 = vpack.c.b16 %v522, %v520
  %v685 = vpack.c.b16 %v525, %v523
  %v686 = vpack.c.b16 %v526, %v524
  %v687 = vpack.c.b16 %v529, %v527
  %v688 = vpack.c.b16 %v530, %v528
  %v689 = vpack.c.b16 %v533, %v531
  %v690 = vpack.c.b16 %v534, %v532
  %v691 = vpack.c.b16 %v537, %v535
  %v692 = vpack.c.b16 %v538, %v536
  %v693 = vpack.c.b16 %v541, %v539
  %v694 = vpack.c.b16 %v542, %v540
  %v695 = vpack.c.b16 %v545, %v543
  %v696 = vpack.c.b16 %v546, %v544
  %v697 = vpack.c.b16 %v549, %v547
  %v698 = vpack.c.b16 %v550, %v548
  %v699 = vpack.c.b16 %v553, %v551
  %v700 = vpack.c.b16 %v554, %v552
  %v701 = vpack.c.b16 %v557, %v555
  %v702 = vpack.c.b16 %v558, %v556
  %v703 = vpack.c.b16 %v561, %v559
  %v704 = vpack.c.b16 %v562, %v560
  %v705 = vpack.c.b16 %v565, %v563
  %v706 = vpack.c.b16 %v566, %v564
  %v707 = vpack.c.b16 %v569, %v567
  %v708 = vpack.c.b16 %v570, %v568
  %v709 = vpack.c.b16 %v573, %v571
  %v710 = vpack.c.b16 %v574, %v572
  %v711 = vpack.c.b16 %v577, %v575
  %v712 = vpack.c.b16 %v578, %v576
  %v713 = vpack.c.b16 %v581, %v579
  %v714 = vpack.c.b16 %v582, %v580
  %v715 = vpack.c.b16 %v585, %v583
  %v716 = vpack.c.b16 %v586, %v584
  %v717 = vpack.c.b16 %v589, %v587
  %v718 = vpack.c.b16 %v590, %v588
  %847 = vmatprep.subr.bf16.mxu0 %v592
  %848 = vmatpush1.bf16.msra.mxu0 %v591
  %849 = vmatprep.subr.bf16.mxu0 %v594
  %850 = vmatpush1.bf16.msra.mxu0 %v593
  %851 = vmatprep.subr.bf16.mxu0 %v596
  %852 = vmatpush1.bf16.msra.mxu0 %v595
  %853 = vmatprep.subr.bf16.mxu0 %v598
  %854 = vmatpush1.bf16.msra.mxu0 %v597
  %855 = vmatprep.subr.bf16.mxu0 %v600
  %856 = vmatpush1.bf16.msra.mxu0 %v599
  %857 = vmatprep.subr.bf16.mxu0 %v602
  %858 = vmatpush1.bf16.msra.mxu0 %v601
  %859 = vmatprep.subr.bf16.mxu0 %v604
  %860 = vmatpush1.bf16.msra.mxu0 %v603
  %861 = vmatprep.subr.bf16.mxu0 %v606
  %862 = vmatpush1.bf16.msra.mxu0 %v605
  %863 = vmatprep.subr.bf16.mxu0 %v608
  %864 = vmatpush1.bf16.msra.mxu0 %v607
  %865 = vmatprep.subr.bf16.mxu0 %v610
  %866 = vmatpush1.bf16.msra.mxu0 %v609
  %867 = vmatprep.subr.bf16.mxu0 %v612
  %868 = vmatpush1.bf16.msra.mxu0 %v611
  %869 = vmatprep.subr.bf16.mxu0 %v614
  %870 = vmatpush1.bf16.msra.mxu0 %v613
  %871 = vmatprep.subr.bf16.mxu0 %v616
  %872 = vmatpush1.bf16.msra.mxu0 %v615
  %873 = vmatprep.subr.bf16.mxu0 %v618
  %874 = vmatpush1.bf16.msra.mxu0 %v617
  %875 = vmatprep.subr.bf16.mxu0 %v620
  %876 = vmatpush1.bf16.msra.mxu0 %v619
  %877 = vmatprep.subr.bf16.mxu0 %v622
  %878 = vmatpush1.bf16.msra.mxu0 %v621
  %879 = vmatprep.mubr.bf16.mxu0 %v192
  %880 = vmatmul.mubr.bf16.gmra.mrb[0].mxu0 %v191
  %v881 = vpop.f32.mrb[0].mxu0
  %v882 = vadd.f32 %v160, %v881
  %v883 = vpop.f32.mrb[0].mxu0
  %v884 = vadd.f32 %v164, %v883
  %v885 = vpop.f32.mrb[0].mxu0
  %v886 = vadd.f32 %v160, %v885
  %v887 = vpop.f32.mrb[0].mxu0
  %v888 = vadd.f32 %v164, %v887
  %889 = vdwg.mxu0
  %890 = vmatprep.subr.bf16.mxu0 %v624
  %891 = vmatpush1.bf16.msra.mxu0 %v623
  %892 = vmatprep.subr.bf16.mxu0 %v626
  %893 = vmatpush1.bf16.msra.mxu0 %v625
  %894 = vmatprep.subr.bf16.mxu0 %v628
  %895 = vmatpush1.bf16.msra.mxu0 %v627
  %896 = vmatprep.subr.bf16.mxu0 %v630
  %897 = vmatpush1.bf16.msra.mxu0 %v629
  %898 = vmatprep.subr.bf16.mxu0 %v632
  %899 = vmatpush1.bf16.msra.mxu0 %v631
  %900 = vmatprep.subr.bf16.mxu0 %v634
  %901 = vmatpush1.bf16.msra.mxu0 %v633
  %902 = vmatprep.subr.bf16.mxu0 %v636
  %903 = vmatpush1.bf16.msra.mxu0 %v635
  %904 = vmatprep.subr.bf16.mxu0 %v638
  %905 = vmatpush1.bf16.msra.mxu0 %v637
  %906 = vmatprep.subr.bf16.mxu0 %v640
  %907 = vmatpush1.bf16.msra.mxu0 %v639
  %908 = vmatprep.subr.bf16.mxu0 %v642
  %909 = vmatpush1.bf16.msra.mxu0 %v641
  %910 = vmatprep.subr.bf16.mxu0 %v644
  %911 = vmatpush1.bf16.msra.mxu0 %v643
  %912 = vmatprep.subr.bf16.mxu0 %v646
  %913 = vmatpush1.bf16.msra.mxu0 %v645
  %914 = vmatprep.subr.bf16.mxu0 %v648
  %915 = vmatpush1.bf16.msra.mxu0 %v647
  %916 = vmatprep.subr.bf16.mxu0 %v650
  %917 = vmatpush1.bf16.msra.mxu0 %v649
  %918 = vmatprep.subr.bf16.mxu0 %v652
  %919 = vmatpush1.bf16.msra.mxu0 %v651
  %920 = vmatprep.subr.bf16.mxu0 %v654
  %921 = vmatpush1.bf16.msra.mxu0 %v653
  %922 = vmatprep.mubr.bf16.mxu0 %v194
  %923 = vmatmul.mubr.bf16.gmra.mrb[0].mxu0 %v193
  %v924 = vpop.f32.mrb[0].mxu0
  %v925 = vadd.f32 %v882, %v924
  %v926 = vpop.f32.mrb[0].mxu0
  %v927 = vadd.f32 %v884, %v926
  %v928 = vpop.f32.mrb[0].mxu0
  %v929 = vadd.f32 %v886, %v928
  %v930 = vpop.f32.mrb[0].mxu0
  %v931 = vadd.f32 %v888, %v930
  %932 = vdwg.mxu0
  %933 = vmatprep.subr.bf16.mxu0 %v656
  %934 = vmatpush1.bf16.msra.mxu0 %v655
  %935 = vmatprep.subr.bf16.mxu0 %v658
  %936 = vmatpush1.bf16.msra.mxu0 %v657
  %937 = vmatprep.subr.bf16.mxu0 %v660
  %938 = vmatpush1.bf16.msra.mxu0 %v659
  %939 = vmatprep.subr.bf16.mxu0 %v662
  %940 = vmatpush1.bf16.msra.mxu0 %v661
  %941 = vmatprep.subr.bf16.mxu0 %v664
  %942 = vmatpush1.bf16.msra.mxu0 %v663
  %943 = vmatprep.subr.bf16.mxu0 %v666
  %944 = vmatpush1.bf16.msra.mxu0 %v665
  %945 = vmatprep.subr.bf16.mxu0 %v668
  %946 = vmatpush1.bf16.msra.mxu0 %v667
  %947 = vmatprep.subr.bf16.mxu0 %v670
  %948 = vmatpush1.bf16.msra.mxu0 %v669
  %949 = vmatprep.subr.bf16.mxu0 %v672
  %950 = vmatpush1.bf16.msra.mxu0 %v671
  %951 = vmatprep.subr.bf16.mxu0 %v674
  %952 = vmatpush1.bf16.msra.mxu0 %v673
  %953 = vmatprep.subr.bf16.mxu0 %v676
  %954 = vmatpush1.bf16.msra.mxu0 %v675
  %955 = vmatprep.subr.bf16.mxu0 %v678
  %956 = vmatpush1.bf16.msra.mxu0 %v677
  %957 = vmatprep.subr.bf16.mxu0 %v680
  %958 = vmatpush1.bf16.msra.mxu0 %v679
  %959 = vmatprep.subr.bf16.mxu0 %v682
  %960 = vmatpush1.bf16.msra.mxu0 %v681
  %961 = vmatprep.subr.bf16.mxu0 %v684
  %962 = vmatpush1.bf16.msra.mxu0 %v683
  %963 = vmatprep.subr.bf16.mxu0 %v686
  %964 = vmatpush1.bf16.msra.mxu0 %v685
  %965 = vmatprep.mubr.bf16.mxu0 %v196
  %966 = vmatmul.mubr.bf16.gmra.mrb[0].mxu0 %v195
  %v967 = vpop.f32.mrb[0].mxu0
  %v968 = vadd.f32 %v925, %v967
  %v969 = vpop.f32.mrb[0].mxu0
  %v970 = vadd.f32 %v927, %v969
  %v971 = vpop.f32.mrb[0].mxu0
  %v972 = vadd.f32 %v929, %v971
  %v973 = vpop.f32.mrb[0].mxu0
  %v974 = vadd.f32 %v931, %v973
  %975 = vdwg.mxu0
  %976 = vmatprep.subr.bf16.mxu0 %v688
  %977 = vmatpush1.bf16.msra.mxu0 %v687
  %978 = vmatprep.subr.bf16.mxu0 %v690
  %979 = vmatpush1.bf16.msra.mxu0 %v689
  %980 = vmatprep.subr.bf16.mxu0 %v692
  %981 = vmatpush1.bf16.msra.mxu0 %v691
  %982 = vmatprep.subr.bf16.mxu0 %v694
  %983 = vmatpush1.bf16.msra.mxu0 %v693
  %984 = vmatprep.subr.bf16.mxu0 %v696
  %985 = vmatpush1.bf16.msra.mxu0 %v695
  %986 = vmatprep.subr.bf16.mxu0 %v698
  %987 = vmatpush1.bf16.msra.mxu0 %v697
  %988 = vmatprep.subr.bf16.mxu0 %v700
  %989 = vmatpush1.bf16.msra.mxu0 %v699
  %990 = vmatprep.subr.bf16.mxu0 %v702
  %991 = vmatpush1.bf16.msra.mxu0 %v701
  %992 = vmatprep.subr.bf16.mxu0 %v704
  %993 = vmatpush1.bf16.msra.mxu0 %v703
  %994 = vmatprep.subr.bf16.mxu0 %v706
  %995 = vmatpush1.bf16.msra.mxu0 %v705
  %996 = vmatprep.subr.bf16.mxu0 %v708
  %997 = vmatpush1.bf16.msra.mxu0 %v707
  %998 = vmatprep.subr.bf16.mxu0 %v710
  %999 = vmatpush1.bf16.msra.mxu0 %v709
  %1000 = vmatprep.subr.bf16.mxu0 %v712
  %1001 = vmatpush1.bf16.msra.mxu0 %v711
  %1002 = vmatprep.subr.bf16.mxu0 %v714
  %1003 = vmatpush1.bf16.msra.mxu0 %v713
  %1004 = vmatprep.subr.bf16.mxu0 %v716
  %1005 = vmatpush1.bf16.msra.mxu0 %v715
  %1006 = vmatprep.subr.bf16.mxu0 %v718
  %1007 = vmatpush1.bf16.msra.mxu0 %v717
  %1008 = vmatprep.mubr.bf16.mxu0 %v198
  %1009 = vmatmul.mubr.bf16.gmra.mrb[0].mxu0 %v197
  %v1010 = vpop.f32.mrb[0].mxu0
  %v1011 = vadd.f32 %v968, %v1010
  %v1012 = vpop.f32.mrb[0].mxu0
  %v1013 = vadd.f32 %v970, %v1012
  %v1014 = vpop.f32.mrb[0].mxu0
  %v1015 = vadd.f32 %v972, %v1014
  %v1016 = vpop.f32.mrb[0].mxu0
  %v1017 = vadd.f32 %v974, %v1016
  %1018 = vdwg.mxu0
  %1019 = vst [vmem:[%s4] sm:$0xff] %v1011
  %1020 = vst [vmem:[%s4 + $0x8] sm:$0xff] %v1013
  %1021 = vst [vmem:[%s4 + $0x10] sm:$0xff] %v1015
  %1022 = vst [vmem:[%s4 + $0x18] sm:$0xff] %v1017
  %v1023 = vld [vmem:[%s0] sm:$0xff]
  %v1024 = vld [vmem:[%s0 + $0x8] sm:$0xff]
  %vm1025 = vcmp.ge.s32.totalorder %v1023, 0
  %vm1026 = vcmp.ge.s32.totalorder %v1024, 0
  %v1027 = vsel %vm1025, 1, 0
  %v1028 = vsel %vm1026, 1, 0
  %v1029 = vcvt.s32.f32 %v1027
  %v1030 = vcvt.s32.f32 %v1028
  %v1031 = vlaneseq
  %v1032 = vand.u32 %v1031, 127
  %1033 = vmax.xlane.f32.xlu0 %v1011
  %v1034 = vpop.xlane.xlu0 %1033
  %1035 = vmax.xlane.f32.xlu0 %v1015
  %v1036 = vpop.xlane.xlu0 %1035
  %v1037 = vsub.f32 %v1011, %v1034
  %v1038 = vsub.f32 %v1015, %v1036
  %v1039 = vmul.f32 %v1037, 1.442695
  %v1040 = vpow.pop %v1039
  %v1041 = vmul.f32 %v1038, 1.442695
  %v1042 = vpow.pop %v1041
  %1043 = vadd.xlane.f32.xlu0 %v1040
  %v1044 = vpop.xlane.xlu0 %1043
  %1045 = vadd.xlane.f32.xlu0 %v1042
  %v1046 = vpop.xlane.xlu0 %1045
  %v1047 = vlog2.pop %v1044
  %v1048 = vmul.f32 %v1047, 0.6931472
  %v1049 = vlog2.pop %v1046
  %v1050 = vmul.f32 %v1049, 0.6931472
  %1051 = vset.pattern.permute.xlu0 0
  %1052 = vperm.xlu0 %1051, %v1023
  %v1053 = vpop.permute.xlu0 %1052
  %1054 = vset.pattern.permute.xlu0 0
  %1055 = vperm.xlu0 %1054, %v1024
  %v1056 = vpop.permute.xlu0 %1055
  %vm1057 = vcmp.eq.s32.totalorder %v1032, %v1053
  %vm1058 = vcmp.eq.s32.totalorder %v1032, %v1056
  %v1059 = vsel %vm1057, 1, 0
  %v1060 = vsel %vm1058, 1, 0
  %v1061 = vcvt.s32.f32 %v1059
  %v1062 = vcvt.s32.f32 %v1060
  %v1063 = vmul.f32 %v1061, %v1037
  %v1064 = vmul.f32 %v1062, %v1038
  %1065 = vadd.xlane.f32.xlu0 %v1063
  %v1066 = vpop.xlane.xlu0 %1065
  %1067 = vadd.xlane.f32.xlu0 %v1064
  %v1068 = vpop.xlane.xlu0 %1067
  %v1069 = vsub.f32 %v1048, %v1066
  %v1070 = vsub.f32 %v1050, %v1068
  %v1071 = vmul.f32 %v1029, %v1069
  %v1072 = vmul.f32 %v1030, %v1070
  %vm1073 = vcmask 7168
  %v1074 = vsel %vm1073, %v1071, 0.0
  %v1075 = vsel %vm1073, %v1072, 0.0
  %v1076 = vadd.f32 %v1074, %v1075
  %1077 = vadd.xlane.f32.xlu0 %v1076
  %v1078 = vpop.xlane.xlu0 %1077
  %v1079 = vrot.slane %v1078, 4
  %v1080 = vadd.f32 %v1078, %v1079
  %v1081 = vrot.slane %v1080, 2
  %v1082 = vadd.f32 %v1080, %v1081
  %v1083 = vrot.slane %v1082, 1
  %v1084 = vadd.f32 %v1082, %v1083
  %s1085 = vtos %v1084
  %v1086 = vmul.f32 %v1037, 0.25
  %v1087 = vmul.f32 %v1038, 0.25
  %1088 = vmax.xlane.f32.xlu0 %v1013
  %v1089 = vpop.xlane.xlu0 %1088
  %1090 = vmax.xlane.f32.xlu0 %v1017
  %v1091 = vpop.xlane.xlu0 %1090
  %v1092 = vsub.f32 %v1013, %v1089
  %v1093 = vsub.f32 %v1017, %v1091
  %v1094 = vmul.f32 %v1092, 0.25
  %v1095 = vmul.f32 %v1093, 0.25
  %v1096 = vmul.f32 %v1086, 1.442695
  %v1097 = vpow.pop %v1096
  %v1098 = vmul.f32 %v1087, 1.442695
  %v1099 = vpow.pop %v1098
  %v1100 = vmul.f32 %v1094, 1.442695
  %v1101 = vpow.pop %v1100
  %v1102 = vmul.f32 %v1095, 1.442695
  %v1103 = vpow.pop %v1102
  %1104 = vadd.xlane.f32.xlu0 %v1097
  %v1105 = vpop.xlane.xlu0 %1104
  %1106 = vadd.xlane.f32.xlu0 %v1099
  %v1107 = vpop.xlane.xlu0 %1106
  %1108 = vadd.xlane.f32.xlu0 %v1101
  %v1109 = vpop.xlane.xlu0 %1108
  %1110 = vadd.xlane.f32.xlu0 %v1103
  %v1111 = vpop.xlane.xlu0 %1110
  %v1112 = vlog2.pop %v1105
  %v1113 = vmul.f32 %v1112, 0.6931472
  %v1114 = vlog2.pop %v1107
  %v1115 = vmul.f32 %v1114, 0.6931472
  %v1116 = vlog2.pop %v1109
  %v1117 = vmul.f32 %v1116, 0.6931472
  %v1118 = vlog2.pop %v1111
  %v1119 = vmul.f32 %v1118, 0.6931472
  %v1120 = vrcp.pop %v1109
  %v1121 = vrcp.pop %v1111
  %v1122 = vmul.f32 %v1101, %v1120
  %v1123 = vmul.f32 %v1103, %v1121
  %v1124 = vsub.f32 %v1094, %v1086
  %v1125 = vsub.f32 %v1095, %v1087
  %v1126 = vsub.f32 %v1113, %v1117
  %v1127 = vsub.f32 %v1115, %v1119
  %v1128 = vadd.f32 %v1124, %v1126
  %v1129 = vadd.f32 %v1125, %v1127
  %v1130 = vmul.f32 %v1122, %v1128
  %v1131 = vmul.f32 %v1123, %v1129
  %1132 = vadd.xlane.f32.xlu0 %v1130
  %v1133 = vpop.xlane.xlu0 %1132
  %1134 = vadd.xlane.f32.xlu0 %v1131
  %v1135 = vpop.xlane.xlu0 %1134
  %v1136 = vmul.f32 %v1029, %v1133
  %v1137 = vmul.f32 %v1030, %v1135
  %v1138 = vsel %vm1073, %v1136, 0.0
  %v1139 = vsel %vm1073, %v1137, 0.0
  %v1140 = vadd.f32 %v1138, %v1139
  %1141 = vadd.xlane.f32.xlu0 %v1140
  %v1142 = vpop.xlane.xlu0 %1141
  %v1143 = vrot.slane %v1142, 4
  %v1144 = vadd.f32 %v1142, %v1143
  %v1145 = vrot.slane %v1144, 2
  %v1146 = vadd.f32 %v1144, %v1145
  %v1147 = vrot.slane %v1146, 1
  %v1148 = vadd.f32 %v1146, %v1147
  %s1149 = vtos %v1148
  %s1150 = smul.f32 %s1149, 16.0
  %s1151 = sadd.f32 %s1085, %s1150
  %v1152 = vstv %s1151
  %1153 = vst [vmem:[%s5] sm:$0xff] %v1152
  // Predicated region
  $region18: #{distiller_forward.1} parent=0 // pred_check
    _
  $region19: #{distiller_forward.1} parent=0 // pred_check_branch
    %1155 = sbr.rel (0) target = $region21
  $region20: #{distiller_forward.1} parent=0 // pred_region
    _
  $region21: #{distiller_forward.1} parent=0 // pred_fallthru
    _
  // Predicated region
  $region22: #{distiller_forward.1} parent=0 // pred_check
    _
  $region23: #{distiller_forward.1} parent=0 // pred_check_branch
    %1157 = sbr.rel (0) target = $region25
  $region24: #{distiller_forward.1} parent=0 // pred_region
    _
  $region25: #{distiller_forward.1} parent=0 // pred_fallthru
    _
  // Predicated region
  $region26: #{distiller_forward.1} parent=0 // pred_check
    _
  $region27: #{distiller_forward.1} parent=0 // pred_check_branch
    %1159 = sbr.rel (0) target = $region29
  $region28: #{distiller_forward.1} parent=0 // pred_region
    _
  $region29: #{distiller_forward.1} parent=0 // pred_fallthru
    _
  // Predicated region
  $region30: #{distiller_forward.1} parent=0 // pred_check
    _
  $region31: #{distiller_forward.1} parent=0 // pred_check_branch
    %1161 = sbr.rel (0) target = $region33
  $region32: #{distiller_forward.1} parent=0 // pred_region
    _
  $region33: #{distiller_forward.1} parent=0 // pred_fallthru
    _

</llo_original>
